<compile_context>
chip_gen: v7x
topology: tpu7x:2x2x1
jax: 0.10.0
libtpu: 0.0.40
codegen_flags: <defaults>
</compile_context>

<pallas_src>
import jax
import jax.numpy as jnp
from jax.experimental import pallas as pl
from jax.experimental.pallas import tpu as pltpu

# ---------------- config ----------------
OTHER_INPUTS = 8
LIDAR_INPUTS = 32
TOTAL_IN = OTHER_INPUTS + LIDAR_INPUTS                # 40
C_OUT = 4
KSIZE = 5
STRIDE = 3
T_OUT = 1 + (LIDAR_INPUTS - KSIZE) // STRIDE          # 10
LIDAR_FEAT = C_OUT * T_OUT                            # 40  (dim_for_convolution)
OUTSHAPE = LIDAR_FEAT + OTHER_INPUTS                  # 48
H1 = 64
H2 = 32
ACTIONS = 4
BIAS_ROWS = 8                                         # bias slab rows (sublane aligned)
BIAS_COLS = 64                                        # = max(OUTSHAPE, H1, H2, ACTIONS)
BATCH = 2
DEFAULT_TILE_B = 1024


def _round_up(n, m):
    return ((n + m - 1) // m) * m


def _choose_tile_b(batch, tile_b):
    """Batch tile: multiple of 16, >=2 grid steps when batch allows (v7x megacore)."""
    tile_b = max(16, _round_up(int(tile_b), 16))
    if batch <= 2 * 16:
        return batch                                  # single full block (always legal)
    half = _round_up((batch + 1) // 2, 16)            # keep at least 2 grid steps
    return min(tile_b, half)


# ---------------- Pallas kernel ----------------
def qnet_kernel(x_ref, w0_ref, w1_ref, w2_ref, w3_ref, bias_ref, out_ref):
    f32 = jnp.float32
    bf16 = jnp.bfloat16

    x = x_ref[...].astype(bf16)                       # (TB, 40)

    bias = bias_ref[...]                              # (8, 64) f32
    b0 = bias[0:1, :OUTSHAPE]                         # (1, 48): zeros | conv bias
    b1 = bias[1:2, :H1]                               # (1, 64)
    b2 = bias[2:3, :H2]                               # (1, 32)
    b3 = bias[3:4, :ACTIONS]                          # (1, 4)

    # Fused stage 0: [identity passthrough of `other` | Conv1d-as-matmul] + bias,
    # ReLU only on the conv columns (== concat(other, relu(flatten(conv)))).
    pre = jnp.dot(x, w0_ref[...], preferred_element_type=f32) + b0      # (TB, 48)
    col = jax.lax.broadcasted_iota(jnp.int32, (1, OUTSHAPE), 1)
    h0 = jnp.where(col >= OTHER_INPUTS, jnp.maximum(pre, 0.0), pre)

    # Linear(48 -> 64) + ReLU.
    h1 = jnp.maximum(
        jnp.dot(h0.astype(bf16), w1_ref[...], preferred_element_type=f32) + b1, 0.0)

    # Linear(64 -> 32) + Tanh.
    h2 = jnp.tanh(
        jnp.dot(h1.astype(bf16), w2_ref[...], preferred_element_type=f32) + b2)

    # Final Linear(32 -> 4).
    out_ref[...] = jnp.dot(h2.astype(bf16), w3_ref[...],
                           preferred_element_type=f32) + b3


def qnet_forward(x, params, tile_b=DEFAULT_TILE_B):
    """x: (B, other_inputs + lidar_inputs) f32 -> (B, possible_actions) f32."""
    B = x.shape[0]
    tb = _choose_tile_b(B, tile_b)
    grid = pl.cdiv(B, tb)

    weight_bytes = 2 * (TOTAL_IN * OUTSHAPE + OUTSHAPE * H1 + H1 * H2 + H2 * ACTIONS) \
        + 4 * BIAS_ROWS * BIAS_COLS
    cost = pl.CostEstimate(
        flops=2 * B * (TOTAL_IN * OUTSHAPE + OUTSHAPE * H1 + H1 * H2 + H2 * ACTIONS),
        transcendentals=B * H2,
        bytes_accessed=B * 4 * (TOTAL_IN + ACTIONS) + weight_bytes)

    return pl.pallas_call(
        qnet_kernel,
        out_shape=jax.ShapeDtypeStruct((B, ACTIONS), jnp.float32),
        grid=(grid,),
        in_specs=[
            pl.BlockSpec((tb, TOTAL_IN), lambda i: (i, 0)),            # x (batch tiled)
            pl.BlockSpec((TOTAL_IN, OUTSHAPE), lambda i: (0, 0)),      # fused stage-0 matrix
            pl.BlockSpec((OUTSHAPE, H1), lambda i: (0, 0)),            # w1
            pl.BlockSpec((H1, H2), lambda i: (0, 0)),                  # w2
            pl.BlockSpec((H2, ACTIONS), lambda i: (0, 0)),             # w3
            pl.BlockSpec((BIAS_ROWS, BIAS_COLS), lambda i: (0, 0)),    # bias slab
        ],
        out_specs=pl.BlockSpec((tb, ACTIONS), lambda i: (i, 0)),
        compiler_params=pltpu.CompilerParams(dimension_semantics=("parallel",)),
        cost_estimate=cost,
    )(x, params['w0'], params['w1'], params['w2'], params['w3'], params['bias'])


# ---------------- deterministic parameter init (torch-style uniform bounds) ----------------
def _uniform(key, shape, fan_in):
    bound = 1.0 / jnp.sqrt(jnp.float32(fan_in))
    return jax.random.uniform(key, shape, jnp.float32, -bound, bound)


def init_params(key):
    ks = jax.random.split(key, 8)
    conv_w = _uniform(ks[0], (C_OUT, 1, KSIZE), 1 * KSIZE)      # Conv1d weight
    conv_b = _uniform(ks[1], (C_OUT,), 1 * KSIZE)               # Conv1d bias
    w1 = _uniform(ks[2], (H1, OUTSHAPE), OUTSHAPE)              # torch Linear: (out, in)
    b1 = _uniform(ks[3], (H1,), OUTSHAPE)
    w2 = _uniform(ks[4], (H2, H1), H1)
    b2 = _uniform(ks[5], (H2,), H1)
    w3 = _uniform(ks[6], (ACTIONS, H2), H2)
    b3 = _uniform(ks[7], (ACTIONS,), H2)
    return conv_w, conv_b, w1, b1, w2, b2, w3, b3


def pack_params(conv_w, conv_b, w1, b1, w2, b2, w3, b3):
    """Glue: fused [identity | conv] matrix, torch->matmul layout, bf16 weights, bias slab."""
    f32, bf16 = jnp.float32, jnp.bfloat16

    # Dense Conv1d(1, C_out, K, stride) matrix: column order c*T_out + t matches
    # torch.flatten(conv_out, start_dim=1).
    cc, tt, kk = jnp.meshgrid(jnp.arange(C_OUT), jnp.arange(T_OUT),
                              jnp.arange(KSIZE), indexing='ij')
    rows = (tt * STRIDE + kk).ravel()                 # lidar input index
    cols = (cc * T_OUT + tt).ravel()                  # flattened conv-feature index
    vals = conv_w[cc.ravel(), 0, kk.ravel()]
    wconv_d = jnp.zeros((LIDAR_INPUTS, LIDAR_FEAT), f32).at[rows, cols].set(vals)

    # Fused stage-0 matrix: identity passthrough for `other`, conv matrix for lidar.
    w0 = jnp.zeros((TOTAL_IN, OUTSHAPE), f32)
    w0 = w0.at[:OTHER_INPUTS, :OTHER_INPUTS].set(jnp.eye(OTHER_INPUTS, dtype=f32))
    w0 = w0.at[OTHER_INPUTS:, OTHER_INPUTS:].set(wconv_d)

    bias = jnp.zeros((BIAS_ROWS, BIAS_COLS), f32)
    bias = bias.at[0, OTHER_INPUTS:OUTSHAPE].set(jnp.repeat(conv_b, T_OUT))
    bias = bias.at[1, :H1].set(b1)
    bias = bias.at[2, :H2].set(b2)
    bias = bias.at[3, :ACTIONS].set(b3)

    return dict(
        w0=w0.astype(bf16),
        w1=w1.T.astype(bf16),
        w2=w2.T.astype(bf16),
        w3=w3.T.astype(bf16),
        bias=bias,
    )


# ---------------- pure-JAX reference (mirrors the PyTorch forward) ----------------
def reference_forward(x, conv_w, conv_b, w1, b1, w2, b2, w3, b3,
                      mm_dtype=jnp.float32):
    """mm_dtype=bfloat16 reproduces the kernel's bf16-operand / f32-accum matmuls."""
    f32 = jnp.float32
    c = lambda a: a.astype(mm_dtype)
    other = x[:, :OTHER_INPUTS]
    lidar = x[:, OTHER_INPUTS:]
    patches = jnp.stack([lidar[:, t * STRIDE:t * STRIDE + KSIZE]
                         for t in range(T_OUT)], axis=1)               # (B, T, K)
    conv = (jnp.einsum('btk,ck->bct', c(patches), c(conv_w[:, 0, :]),
                       preferred_element_type=f32)
            + conv_b[None, :, None])
    conv = jnp.maximum(conv, 0.0)                                      # lidar ReLU
    feat = conv.reshape(x.shape[0], -1)                                # flatten(start_dim=1)
    h = jnp.concatenate([other, feat], axis=1)
    h = jnp.maximum(jnp.dot(c(h), c(w1.T), preferred_element_type=f32) + b1, 0.0)
    h = jnp.tanh(jnp.dot(c(h), c(w2.T), preferred_element_type=f32) + b2)
    return jnp.dot(c(h), c(w3.T), preferred_element_type=f32) + b3


if __name__ == "__main__":
    key = jax.random.PRNGKey(0)
    pkey, xkey, xkey2 = jax.random.split(key, 3)

    raw = init_params(pkey)
    params = pack_params(*raw)

    # Small-shape check (batch=2, features = 8 other + 32 lidar).
    x = jax.random.normal(xkey, (BATCH, TOTAL_IN), jnp.float32)
    out = jax.block_until_ready(qnet_forward(x, params))
    if out.shape != (BATCH, ACTIONS):
        raise AssertionError(f"unexpected output shape {out.shape}")

    ref_bf16 = reference_forward(x, *raw, mm_dtype=jnp.bfloat16)
    if not bool(jnp.allclose(out, ref_bf16, rtol=1e-3, atol=1e-3)):
        raise AssertionError(f"kernel vs bf16 reference mismatch:\n{out}\n{ref_bf16}")

    ref_f32 = reference_forward(x, *raw, mm_dtype=jnp.float32)
    if not bool(jnp.allclose(out, ref_f32, rtol=5e-2, atol=5e-2)):
        raise AssertionError(f"kernel vs f32 reference mismatch:\n{out}\n{ref_f32}")

    # Larger batch exercises the multi-step grid and a partial (masked) last block.
    x2 = jax.random.normal(xkey2, (600, TOTAL_IN), jnp.float32)
    out2 = jax.block_until_ready(qnet_forward(x2, params))
    ref2 = reference_forward(x2, *raw, mm_dtype=jnp.bfloat16)
    if not bool(jnp.allclose(out2, ref2, rtol=1e-3, atol=1e-3)):
        raise AssertionError("kernel vs reference mismatch on batched grid path")

    print("KERNEL_OK")
</pallas_src>

<mosaic_0001>
module attributes {stable_mosaic.version = 11 : i64} {
  func.func @qnet_kernel(%arg0: i32, %arg1: memref<2x40xf32, #tpu.memory_space<vmem>>, %arg2: memref<40x48xbf16, #tpu.memory_space<vmem>>, %arg3: memref<48x64xbf16, #tpu.memory_space<vmem>>, %arg4: memref<64x32xbf16, #tpu.memory_space<vmem>>, %arg5: memref<32x4xbf16, #tpu.memory_space<vmem>>, %arg6: memref<8x64xf32, #tpu.memory_space<vmem>>, %arg7: memref<2x4xf32, #tpu.memory_space<vmem>>) attributes {dimension_semantics = [#tpu.dimension_semantics<parallel>], iteration_bounds = array<i64: 1>, scalar_prefetch = 0 : i64, scratch_operands = 0 : i64, tpu.core_type = #tpu.core_type<tc>, window_params = [{transform_indices = @transform_0, window_bounds = array<i64: 2, 40>}, {pipeline_mode = #tpu.pipeline_mode<synchronous>, transform_indices = @transform_1, window_bounds = array<i64: 40, 48>}, {pipeline_mode = #tpu.pipeline_mode<synchronous>, transform_indices = @transform_2, window_bounds = array<i64: 48, 64>}, {pipeline_mode = #tpu.pipeline_mode<synchronous>, transform_indices = @transform_3, window_bounds = array<i64: 64, 32>}, {pipeline_mode = #tpu.pipeline_mode<synchronous>, transform_indices = @transform_4, window_bounds = array<i64: 32, 4>}, {pipeline_mode = #tpu.pipeline_mode<synchronous>, transform_indices = @transform_5, window_bounds = array<i64: 8, 64>}, {transform_indices = @transform_6, window_bounds = array<i64: 2, 4>}]} {
    %c0 = arith.constant 0 : index
    %c0_0 = arith.constant 0 : index
    %0 = vector.load %arg1[%c0, %c0_0] : memref<2x40xf32, #tpu.memory_space<vmem>>, vector<2x40xf32>
    %1 = arith.truncf %0 : vector<2x40xf32> to vector<2x40xbf16>
    %c0_1 = arith.constant 0 : index
    %c0_2 = arith.constant 0 : index
    %2 = vector.load %arg6[%c0_1, %c0_2] : memref<8x64xf32, #tpu.memory_space<vmem>>, vector<8x64xf32>
    %3 = vector.extract_strided_slice %2 {offsets = [0, 0], sizes = [1, 48], strides = [1, 1]} : vector<8x64xf32> to vector<1x48xf32>
    %4 = vector.extract_strided_slice %2 {offsets = [1, 0], sizes = [1, 64], strides = [1, 1]} : vector<8x64xf32> to vector<1x64xf32>
    %5 = vector.extract_strided_slice %2 {offsets = [2, 0], sizes = [1, 32], strides = [1, 1]} : vector<8x64xf32> to vector<1x32xf32>
    %6 = vector.extract_strided_slice %2 {offsets = [3, 0], sizes = [1, 4], strides = [1, 1]} : vector<8x64xf32> to vector<1x4xf32>
    %c0_3 = arith.constant 0 : index
    %c0_4 = arith.constant 0 : index
    %7 = vector.load %arg2[%c0_3, %c0_4] : memref<40x48xbf16, #tpu.memory_space<vmem>>, vector<40x48xbf16>
    %cst = arith.constant dense<0.000000e+00> : vector<2x48xf32>
    %8 = tpu.matmul %1, %7, %cst {dimension_numbers = #tpu.dot_dimension_numbers<[1], [0], [0], [1], [0, 0, 1, 1], [], []>} : vector<2x40xbf16>, vector<40x48xbf16>, vector<2x48xf32> -> vector<2x48xf32>
    %9 = vector.broadcast %3 : vector<1x48xf32> to vector<2x48xf32>
    %10 = arith.addf %8, %9 : vector<2x48xf32>
    %11 = tpu.iota {dimensions = array<i32: 1>} : vector<1x48xi32>
    %c8_i32 = arith.constant 8 : i32
    %12 = vector.broadcast %c8_i32 : i32 to vector<1x48xi32>
    %13 = arith.cmpi sge, %11, %12 : vector<1x48xi32>
    %cst_5 = arith.constant 0.000000e+00 : f32
    %14 = vector.broadcast %cst_5 : f32 to vector<2x48xf32>
    %15 = arith.maximumf %10, %14 : vector<2x48xf32>
    %16 = vector.shape_cast %13 : vector<1x48xi1> to vector<1x48xi1>
    %17 = vector.broadcast %16 : vector<1x48xi1> to vector<2x48xi1>
    %18 = arith.select %17, %15, %10 : vector<2x48xi1>, vector<2x48xf32>
    %19 = arith.truncf %18 : vector<2x48xf32> to vector<2x48xbf16>
    %c0_6 = arith.constant 0 : index
    %c0_7 = arith.constant 0 : index
    %20 = vector.load %arg3[%c0_6, %c0_7] : memref<48x64xbf16, #tpu.memory_space<vmem>>, vector<48x64xbf16>
    %cst_8 = arith.constant dense<0.000000e+00> : vector<2x64xf32>
    %21 = tpu.matmul %19, %20, %cst_8 {dimension_numbers = #tpu.dot_dimension_numbers<[1], [0], [0], [1], [0, 0, 1, 1], [], []>} : vector<2x48xbf16>, vector<48x64xbf16>, vector<2x64xf32> -> vector<2x64xf32>
    %22 = vector.broadcast %4 : vector<1x64xf32> to vector<2x64xf32>
    %23 = arith.addf %21, %22 : vector<2x64xf32>
    %cst_9 = arith.constant 0.000000e+00 : f32
    %24 = vector.broadcast %cst_9 : f32 to vector<2x64xf32>
    %25 = arith.maximumf %23, %24 : vector<2x64xf32>
    %26 = arith.truncf %25 : vector<2x64xf32> to vector<2x64xbf16>
    %c0_10 = arith.constant 0 : index
    %c0_11 = arith.constant 0 : index
    %27 = vector.load %arg4[%c0_10, %c0_11] : memref<64x32xbf16, #tpu.memory_space<vmem>>, vector<64x32xbf16>
    %cst_12 = arith.constant dense<0.000000e+00> : vector<2x32xf32>
    %28 = tpu.matmul %26, %27, %cst_12 {dimension_numbers = #tpu.dot_dimension_numbers<[1], [0], [0], [1], [0, 0, 1, 1], [], []>} : vector<2x64xbf16>, vector<64x32xbf16>, vector<2x32xf32> -> vector<2x32xf32>
    %29 = vector.broadcast %5 : vector<1x32xf32> to vector<2x32xf32>
    %30 = arith.addf %28, %29 : vector<2x32xf32>
    %31 = math.tanh %30 : vector<2x32xf32>
    %32 = arith.truncf %31 : vector<2x32xf32> to vector<2x32xbf16>
    %c0_13 = arith.constant 0 : index
    %c0_14 = arith.constant 0 : index
    %33 = vector.load %arg5[%c0_13, %c0_14] : memref<32x4xbf16, #tpu.memory_space<vmem>>, vector<32x4xbf16>
    %cst_15 = arith.constant dense<0.000000e+00> : vector<2x4xf32>
    %34 = tpu.matmul %32, %33, %cst_15 {dimension_numbers = #tpu.dot_dimension_numbers<[1], [0], [0], [1], [0, 0, 1, 1], [], []>} : vector<2x32xbf16>, vector<32x4xbf16>, vector<2x4xf32> -> vector<2x4xf32>
    %35 = vector.broadcast %6 : vector<1x4xf32> to vector<2x4xf32>
    %36 = arith.addf %34, %35 : vector<2x4xf32>
    %c0_16 = arith.constant 0 : index
    %c0_17 = arith.constant 0 : index
    %37 = vector.load %arg7[%c0_16, %c0_17] : memref<2x4xf32, #tpu.memory_space<vmem>>, vector<2x4xf32>
    tpu.vector_store %arg7[%c0_16, %c0_17], %36 {strides = array<i32>} : memref<2x4xf32, #tpu.memory_space<vmem>>, vector<2x4xf32>,
    return
  }
  func.func @transform_0(%arg0: i32) -> (i32, i32) {
    %c0_i32 = arith.constant 0 : i32
    %c0_i32_0 = arith.constant 0 : i32
    return %arg0, %c0_i32 : i32, i32
  }
  func.func @transform_1(%arg0: i32) -> (i32, i32) {
    %c0_i32 = arith.constant 0 : i32
    %c0_i32_0 = arith.constant 0 : i32
    %c0_i32_1 = arith.constant 0 : i32
    return %c0_i32, %c0_i32_0 : i32, i32
  }
  func.func @transform_2(%arg0: i32) -> (i32, i32) {
    %c0_i32 = arith.constant 0 : i32
    %c0_i32_0 = arith.constant 0 : i32
    %c0_i32_1 = arith.constant 0 : i32
    return %c0_i32, %c0_i32_0 : i32, i32
  }
  func.func @transform_3(%arg0: i32) -> (i32, i32) {
    %c0_i32 = arith.constant 0 : i32
    %c0_i32_0 = arith.constant 0 : i32
    %c0_i32_1 = arith.constant 0 : i32
    return %c0_i32, %c0_i32_0 : i32, i32
  }
  func.func @transform_4(%arg0: i32) -> (i32, i32) {
    %c0_i32 = arith.constant 0 : i32
    %c0_i32_0 = arith.constant 0 : i32
    %c0_i32_1 = arith.constant 0 : i32
    return %c0_i32, %c0_i32_0 : i32, i32
  }
  func.func @transform_5(%arg0: i32) -> (i32, i32) {
    %c0_i32 = arith.constant 0 : i32
    %c0_i32_0 = arith.constant 0 : i32
    %c0_i32_1 = arith.constant 0 : i32
    return %c0_i32, %c0_i32_0 : i32, i32
  }
  func.func @transform_6(%arg0: i32) -> (i32, i32) {
    %c0_i32 = arith.constant 0 : i32
    %c0_i32_0 = arith.constant 0 : i32
    return %arg0, %c0_i32 : i32, i32
  }
}

</mosaic_0001>

<llo_original>
// kernel: tpu_custom_call.1
$region0: #{tpu_custom_call.1}
  #allocation0 [shape = 'u32[]', space=smem, size = 0x4, offset = 0x4, fixed_abs, tag = 'smem constant byte address 0x4 - core index']
  #allocation1 [shape = 'u32[144,128]{1,0:T(1,128)}', space=vmem, size = 0x12000, scoped, tag = 'internal scratch']
  %s0 = inlined_call_operand.vmem [shape: f32[2,40], index: 0, kind: input, shape index: {}]
  %s1 = inlined_call_operand.vmem [shape: bf16[40,48], index: 1, kind: input, shape index: {}]
  %s2 = inlined_call_operand.vmem [shape: bf16[48,64], index: 2, kind: input, shape index: {}]
  %s3 = inlined_call_operand.vmem [shape: bf16[64,32], index: 3, kind: input, shape index: {}]
  %s4 = inlined_call_operand.vmem [shape: bf16[32,4], index: 4, kind: input, shape index: {}]
  %s5 = inlined_call_operand.vmem [shape: f32[8,64], index: 5, kind: input, shape index: {}]
  %s6 = inlined_call_operand.hbm [shape: f32[2,4], index: 6, kind: output, shape index: {}]
  %s7 = sld [smem:[#allocation0]]
  $region34: #{tpu_custom_call.1} parent=0
    _
  %s9 = ssub.s32 1, %s7
  %s10 = scalar_select 0, %s9, %s7
  $region1: #{tpu_custom_call.1} parent=0
    #allocation2 [shape = 'u8[1024]{0}', space=vmem, size = 0x400, scoped, tag = 'output window, operand 0, single buffered']
    #allocation3 [shape = 's32[1]{0}', space=sflag, size = 0x4, scoped, tag = 'scoped memory for tpu_custom_call.1']
    %11 = vsyncpa [#allocation3], 0
    // Predicated region
    $region2: #{tpu_custom_call.1} parent=1 // pred_check
      _
    $region3: #{tpu_custom_call.1} parent=1 // pred_check_branch
      %13 = sbr.rel (0) target = $region5
    $region4: #{tpu_custom_call.1} parent=1 // pred_region
      _
    $region5: #{tpu_custom_call.1} parent=1 // pred_fallthru
      _
    // Predicated region
    $region6: #{tpu_custom_call.1} parent=1 // pred_check
      _
    $region7: #{tpu_custom_call.1} parent=1 // pred_check_branch
      %15 = sbr.rel (0) target = $region9
    $region8: #{tpu_custom_call.1} parent=1 // pred_region
      _
    $region9: #{tpu_custom_call.1} parent=1 // pred_fallthru
      _
    // Predicated region
    $region10: #{tpu_custom_call.1} parent=1 // pred_check
      _
    $region11: #{tpu_custom_call.1} parent=1 // pred_check_branch
      %17 = sbr.rel (0) target = $region13
    $region12: #{tpu_custom_call.1} parent=1 // pred_region
      _
    $region13: #{tpu_custom_call.1} parent=1 // pred_fallthru
      _
    // Predicated region
    $region14: #{tpu_custom_call.1} parent=1 // pred_check
      _
    $region15: #{tpu_custom_call.1} parent=1 // pred_check_branch
      %19 = sbr.rel (0) target = $region17
    $region16: #{tpu_custom_call.1} parent=1 // pred_region
      _
    $region17: #{tpu_custom_call.1} parent=1 // pred_fallthru
      _
    // Predicated region
    $region18: #{tpu_custom_call.1} parent=1 // pred_check
      _
    $region19: #{tpu_custom_call.1} parent=1 // pred_check_branch
      %21 = sbr.rel (0) target = $region21
    $region20: #{tpu_custom_call.1} parent=1 // pred_region
      _
    $region21: #{tpu_custom_call.1} parent=1 // pred_fallthru
      _
    // Predicated region
    $region22: #{tpu_custom_call.1} parent=1 // pred_check
      _
    $region23: #{tpu_custom_call.1} parent=1 // pred_check_branch
      %23 = sbr.rel (0) target = $region25
    $region24: #{tpu_custom_call.1} parent=1 // pred_region
      _
    $region25: #{tpu_custom_call.1} parent=1 // pred_fallthru
      _
    %v25 = vld [vmem:[%s0] sm:$0x3]
    %v26 = vpack.c.bf16 %v25, %v25
    %v27 = vld [vmem:[%s5] sm:$0xff]
    %v28 = vld [vmem:[%s1] sm:$0xf]
    %v29 = vld [vmem:[%s1 + $0x4] sm:$0xf]
    %v30 = vld [vmem:[%s1 + $0x8] sm:$0xf]
    %v31 = vld [vmem:[%s1 + $0xc] sm:$0xf]
    %v32 = vld [vmem:[%s1 + $0x10] sm:$0xf]
    %v33 = vlaneseq
    %v34 = vshrl.u32 %v33, 7
    %v35 = vsub.s32 0, %v34
    %v36 = vrot.slane %v27, %v35
    %v42 = vunpack.c.l.b16 %v28
    %v43 = vunpack.c.l.b16 %v29
    %v44 = vunpack.c.l.b16 %v30
    %v45 = vunpack.c.l.b16 %v31
    %v46 = vunpack.c.l.b16 %v32
    %v47 = vpack.c.b16 %v43, %v42
    %v48 = vpack.c.b16 %v45, %v44
    %v49 = vpack.c.b16 %v46, %v46
    %vm52 = vcmask 326656
    %v54 = vsel %vm52, %v26, 0
    %vm56 = vcmask 1043456
    %v58 = vsel %vm56, %v49, 0
    %60 = vmatprep.subr.bf16.mxu0 0
    %61 = vmatpush1.bf16.msra.mxu0 %v47
    %62 = vmatprep.subr.bf16.mxu0 0
    %63 = vmatpush1.bf16.msra.mxu0 %v48
    %64 = vmatprep.subr.bf16.mxu0 0
    %65 = vmatpush1.bf16.msra.mxu0 %v58
    %66 = vmatprep.subr.bf16.mxu0 0
    %67 = vmatpush1.bf16.msra.mxu0 0
    %68 = vmatprep.subr.bf16.mxu0 0
    %69 = vmatpush1.bf16.msra.mxu0 0
    %70 = vmatprep.subr.bf16.mxu0 0
    %71 = vmatpush1.bf16.msra.mxu0 0
    %72 = vmatprep.subr.bf16.mxu0 0
    %73 = vmatpush1.bf16.msra.mxu0 0
    %74 = vmatprep.subr.bf16.mxu0 0
    %75 = vmatpush1.bf16.msra.mxu0 0
    %76 = vmatprep.subr.bf16.mxu0 0
    %77 = vmatpush1.bf16.msra.mxu0 0
    %78 = vmatprep.subr.bf16.mxu0 0
    %79 = vmatpush1.bf16.msra.mxu0 0
    %80 = vmatprep.subr.bf16.mxu0 0
    %81 = vmatpush1.bf16.msra.mxu0 0
    %82 = vmatprep.subr.bf16.mxu0 0
    %83 = vmatpush1.bf16.msra.mxu0 0
    %84 = vmatprep.subr.bf16.mxu0 0
    %85 = vmatpush1.bf16.msra.mxu0 0
    %86 = vmatprep.subr.bf16.mxu0 0
    %87 = vmatpush1.bf16.msra.mxu0 0
    %88 = vmatprep.subr.bf16.mxu0 0
    %89 = vmatpush1.bf16.msra.mxu0 0
    %90 = vmatprep.subr.bf16.mxu0 0
    %91 = vmatpush1.bf16.msra.mxu0 0
    %92 = vmatprep.mubr.bf16.mxu0 0
    %93 = vmatmul.mubr.bf16.gmra.mrb[0].mxu0 %v54
    %v94 = vpop.f32.mrb[0].mxu0
    %v95 = vadd.f32 %v36, %v94
    %v96 = vpop.f32.mrb[0].mxu0
    %v97 = vpop.f32.mrb[0].mxu0
    %v98 = vpop.f32.mrb[0].mxu0
    %99 = vdwg.mxu0
    %v100 = vlaneseq
    %v101 = vand.u32 %v100, 127
    %vm102 = vcmp.ge.s32.totalorder %v101, 8
    %v103 = vmax.f32 %v95, 0.0
    %v104 = vsel %vm102, 1, 0
    %vm105 = vcmp.eq.s32.totalorder %v104, 1
    %v106 = vsel %vm105, %v103, %v95
    %v107 = vpack.c.bf16 %v106, %v106
    %v108 = vld [vmem:[%s2] sm:$0xf]
    %v109 = vld [vmem:[%s2 + $0x4] sm:$0xf]
    %v110 = vld [vmem:[%s2 + $0x8] sm:$0xf]
    %v111 = vld [vmem:[%s2 + $0xc] sm:$0xf]
    %v112 = vld [vmem:[%s2 + $0x10] sm:$0xf]
    %v113 = vld [vmem:[%s2 + $0x14] sm:$0xf]
    %v114 = vlaneseq
    %v115 = vshrl.u32 %v114, 7
    %v116 = vsub.s32 1, %v115
    %v117 = vrot.slane %v27, %v116
    %v124 = vunpack.c.l.b16 %v108
    %v125 = vunpack.c.l.b16 %v109
    %v126 = vunpack.c.l.b16 %v110
    %v127 = vunpack.c.l.b16 %v111
    %v128 = vunpack.c.l.b16 %v112
    %v129 = vunpack.c.l.b16 %v113
    %v130 = vpack.c.b16 %v125, %v124
    %v131 = vpack.c.b16 %v127, %v126
    %v132 = vpack.c.b16 %v129, %v128
    %vm136 = vcmask 392192
    %v138 = vsel %vm136, %v107, 0
    %140 = vmatprep.subr.bf16.mxu0 0
    %141 = vmatpush1.bf16.msra.mxu0 %v130
    %142 = vmatprep.subr.bf16.mxu0 0
    %143 = vmatpush1.bf16.msra.mxu0 %v131
    %144 = vmatprep.subr.bf16.mxu0 0
    %145 = vmatpush1.bf16.msra.mxu0 %v132
    %146 = vmatprep.subr.bf16.mxu0 0
    %147 = vmatpush1.bf16.msra.mxu0 0
    %148 = vmatprep.subr.bf16.mxu0 0
    %149 = vmatpush1.bf16.msra.mxu0 0
    %150 = vmatprep.subr.bf16.mxu0 0
    %151 = vmatpush1.bf16.msra.mxu0 0
    %152 = vmatprep.subr.bf16.mxu0 0
    %153 = vmatpush1.bf16.msra.mxu0 0
    %154 = vmatprep.subr.bf16.mxu0 0
    %155 = vmatpush1.bf16.msra.mxu0 0
    %156 = vmatprep.subr.bf16.mxu0 0
    %157 = vmatpush1.bf16.msra.mxu0 0
    %158 = vmatprep.subr.bf16.mxu0 0
    %159 = vmatpush1.bf16.msra.mxu0 0
    %160 = vmatprep.subr.bf16.mxu0 0
    %161 = vmatpush1.bf16.msra.mxu0 0
    %162 = vmatprep.subr.bf16.mxu0 0
    %163 = vmatpush1.bf16.msra.mxu0 0
    %164 = vmatprep.subr.bf16.mxu0 0
    %165 = vmatpush1.bf16.msra.mxu0 0
    %166 = vmatprep.subr.bf16.mxu0 0
    %167 = vmatpush1.bf16.msra.mxu0 0
    %168 = vmatprep.subr.bf16.mxu0 0
    %169 = vmatpush1.bf16.msra.mxu0 0
    %170 = vmatprep.subr.bf16.mxu0 0
    %171 = vmatpush1.bf16.msra.mxu0 0
    %172 = vmatprep.mubr.bf16.mxu0 0
    %173 = vmatmul.mubr.bf16.gmra.mrb[0].mxu0 %v138
    %v174 = vpop.f32.mrb[0].mxu0
    %v175 = vadd.f32 %v117, %v174
    %v176 = vpop.f32.mrb[0].mxu0
    %v177 = vpop.f32.mrb[0].mxu0
    %v178 = vpop.f32.mrb[0].mxu0
    %179 = vdwg.mxu0
    %v180 = vmax.f32 %v175, 0.0
    %v181 = vpack.c.bf16 %v180, %v180
    %v182 = vld [vmem:[%s3] sm:$0xf]
    %v183 = vld [vmem:[%s3 + $0x4] sm:$0xf]
    %v184 = vld [vmem:[%s3 + $0x8] sm:$0xf]
    %v185 = vld [vmem:[%s3 + $0xc] sm:$0xf]
    %v186 = vld [vmem:[%s3 + $0x10] sm:$0xf]
    %v187 = vld [vmem:[%s3 + $0x14] sm:$0xf]
    %v188 = vld [vmem:[%s3 + $0x18] sm:$0xf]
    %v189 = vld [vmem:[%s3 + $0x1c] sm:$0xf]
    %v190 = vlaneseq
    %v191 = vshrl.u32 %v190, 7
    %v192 = vsub.s32 2, %v191
    %v193 = vrot.slane %v27, %v192
    %v202 = vunpack.c.l.b16 %v182
    %v203 = vunpack.c.l.b16 %v183
    %v204 = vunpack.c.l.b16 %v184
    %v205 = vunpack.c.l.b16 %v185
    %v206 = vunpack.c.l.b16 %v186
    %v207 = vunpack.c.l.b16 %v187
    %v208 = vunpack.c.l.b16 %v188
    %v209 = vunpack.c.l.b16 %v189
    %v210 = vpack.c.b16 %v203, %v202
    %v211 = vpack.c.b16 %v205, %v204
    %v212 = vpack.c.b16 %v207, %v206
    %v213 = vpack.c.b16 %v209, %v208
    %vm218 = vcmask 523264
    %v220 = vsel %vm218, %v181, 0
    %222 = vmatprep.subr.bf16.mxu0 0
    %223 = vmatpush1.bf16.msra.mxu0 %v210
    %224 = vmatprep.subr.bf16.mxu0 0
    %225 = vmatpush1.bf16.msra.mxu0 %v211
    %226 = vmatprep.subr.bf16.mxu0 0
    %227 = vmatpush1.bf16.msra.mxu0 %v212
    %228 = vmatprep.subr.bf16.mxu0 0
    %229 = vmatpush1.bf16.msra.mxu0 %v213
    %230 = vmatprep.subr.bf16.mxu0 0
    %231 = vmatpush1.bf16.msra.mxu0 0
    %232 = vmatprep.subr.bf16.mxu0 0
    %233 = vmatpush1.bf16.msra.mxu0 0
    %234 = vmatprep.subr.bf16.mxu0 0
    %235 = vmatpush1.bf16.msra.mxu0 0
    %236 = vmatprep.subr.bf16.mxu0 0
    %237 = vmatpush1.bf16.msra.mxu0 0
    %238 = vmatprep.subr.bf16.mxu0 0
    %239 = vmatpush1.bf16.msra.mxu0 0
    %240 = vmatprep.subr.bf16.mxu0 0
    %241 = vmatpush1.bf16.msra.mxu0 0
    %242 = vmatprep.subr.bf16.mxu0 0
    %243 = vmatpush1.bf16.msra.mxu0 0
    %244 = vmatprep.subr.bf16.mxu0 0
    %245 = vmatpush1.bf16.msra.mxu0 0
    %246 = vmatprep.subr.bf16.mxu0 0
    %247 = vmatpush1.bf16.msra.mxu0 0
    %248 = vmatprep.subr.bf16.mxu0 0
    %249 = vmatpush1.bf16.msra.mxu0 0
    %250 = vmatprep.subr.bf16.mxu0 0
    %251 = vmatpush1.bf16.msra.mxu0 0
    %252 = vmatprep.subr.bf16.mxu0 0
    %253 = vmatpush1.bf16.msra.mxu0 0
    %254 = vmatprep.mubr.bf16.mxu0 0
    %255 = vmatmul.mubr.bf16.gmra.mrb[0].mxu0 %v220
    %v256 = vpop.f32.mrb[0].mxu0
    %v257 = vadd.f32 %v193, %v256
    %v258 = vpop.f32.mrb[0].mxu0
    %v259 = vpop.f32.mrb[0].mxu0
    %v260 = vpop.f32.mrb[0].mxu0
    %261 = vdwg.mxu0
    %v262 = vtanh.pop %v257
    %v263 = vpack.c.bf16 %v262, %v262
    %v264 = vld [vmem:[%s4] sm:$0xf]
    %v265 = vld [vmem:[%s4 + $0x4] sm:$0xf]
    %v266 = vld [vmem:[%s4 + $0x8] sm:$0xf]
    %v267 = vld [vmem:[%s4 + $0xc] sm:$0xf]
    %v268 = vlaneseq
    %v269 = vshrl.u32 %v268, 7
    %v270 = vsub.s32 3, %v269
    %v271 = vrot.slane %v27, %v270
    %v276 = vunpack.c.l.b16 %v264
    %v277 = vunpack.c.l.b16 %v265
    %v278 = vunpack.c.l.b16 %v266
    %v279 = vunpack.c.l.b16 %v267
    %v280 = vpack.c.b16 %v277, %v276
    %v281 = vpack.c.b16 %v279, %v278
    %vm284 = vcmask 261120
    %v286 = vsel %vm284, %v263, 0
    %288 = vmatprep.subr.bf16.mxu0 0
    %289 = vmatpush1.bf16.msra.mxu0 %v280
    %290 = vmatprep.subr.bf16.mxu0 0
    %291 = vmatpush1.bf16.msra.mxu0 %v281
    %292 = vmatprep.subr.bf16.mxu0 0
    %293 = vmatpush1.bf16.msra.mxu0 0
    %294 = vmatprep.subr.bf16.mxu0 0
    %295 = vmatpush1.bf16.msra.mxu0 0
    %296 = vmatprep.subr.bf16.mxu0 0
    %297 = vmatpush1.bf16.msra.mxu0 0
    %298 = vmatprep.subr.bf16.mxu0 0
    %299 = vmatpush1.bf16.msra.mxu0 0
    %300 = vmatprep.subr.bf16.mxu0 0
    %301 = vmatpush1.bf16.msra.mxu0 0
    %302 = vmatprep.subr.bf16.mxu0 0
    %303 = vmatpush1.bf16.msra.mxu0 0
    %304 = vmatprep.subr.bf16.mxu0 0
    %305 = vmatpush1.bf16.msra.mxu0 0
    %306 = vmatprep.subr.bf16.mxu0 0
    %307 = vmatpush1.bf16.msra.mxu0 0
    %308 = vmatprep.subr.bf16.mxu0 0
    %309 = vmatpush1.bf16.msra.mxu0 0
    %310 = vmatprep.subr.bf16.mxu0 0
    %311 = vmatpush1.bf16.msra.mxu0 0
    %312 = vmatprep.subr.bf16.mxu0 0
    %313 = vmatpush1.bf16.msra.mxu0 0
    %314 = vmatprep.subr.bf16.mxu0 0
    %315 = vmatpush1.bf16.msra.mxu0 0
    %316 = vmatprep.subr.bf16.mxu0 0
    %317 = vmatpush1.bf16.msra.mxu0 0
    %318 = vmatprep.subr.bf16.mxu0 0
    %319 = vmatpush1.bf16.msra.mxu0 0
    %320 = vmatprep.mubr.bf16.mxu0 0
    %321 = vmatmul.mubr.bf16.gmra.mrb[0].mxu0 %v286
    %v322 = vpop.f32.mrb[0].mxu0
    %v323 = vadd.f32 %v271, %v322
    %v324 = vpop.f32.mrb[0].mxu0
    %v325 = vpop.f32.mrb[0].mxu0
    %v326 = vpop.f32.mrb[0].mxu0
    %327 = vdwg.mxu0
    %vm328 = vcmask 25600
    %329 = vst.msk [vmem:[#allocation2] sm:$0x3] %vm328, %v323
    // Predicated region
    $region26: #{tpu_custom_call.1} parent=1 // pred_check
      _
    $region27: #{tpu_custom_call.1} parent=1 // pred_check_branch
      %331 = sbr.rel (0) target = $region29
    $region28: #{tpu_custom_call.1} parent=1 // pred_region
      %s333 = ssub.s32 32, 32
      %334 = vsyncadd [#allocation3], %s333
      %s336 = sshll.u32 [#allocation2], 4
      %s337 = int_to_ptr.vmem [resolvable:$true] %s336
      %339 = dma.vmem_to_hbm [thread:$0]  %s337, 32, %s6, [#allocation3]
    $region29: #{tpu_custom_call.1} parent=1 // pred_fallthru
      _
    // Predicated region
    $region30: #{tpu_custom_call.1} parent=1 // pred_check
      _
    $region31: #{tpu_custom_call.1} parent=1 // pred_check_branch
      %341 = sbr.rel (0) target = $region33
    $region32: #{tpu_custom_call.1} parent=1 // pred_region
      %342 = dma.done [#allocation3], 32
    $region33: #{tpu_custom_call.1} parent=1 // pred_fallthru
      _
    %343 = vsyncpa [#allocation3], 1

</llo_original>
